<compile_context>
chip_gen: v5e
topology: v5e:2x2
jax: 0.10.0
libtpu: 0.0.40
codegen_flags: <defaults>
</compile_context>

<pallas_src>
import functools

import jax
import jax.numpy as jnp
from jax.experimental import pallas as pl
from jax.experimental.pallas import tpu as pltpu


def _cdiv(a: int, b: int) -> int:
    return -(-a // b)


def _round_up(x: int, m: int) -> int:
    return _cdiv(x, m) * m


# ---------------------------------------------------------------------------
# Hardware capability query (generation-aware budgets).
# ---------------------------------------------------------------------------
def _tpu_caps():
    """Returns (vmem_capacity_bytes, has_two_tensorcores)."""
    vmem = None
    two_tc = None
    try:
        info = pltpu.get_tpu_info()
        for name in ("vmem_capacity_bytes", "vmem_bytes", "vmem_size_bytes"):
            val = getattr(info, name, None)
            if val is None:
                continue
            try:
                v = int(val)
            except Exception:
                continue
            if v > 0:
                vmem = v
                break
        for name in ("num_cores", "num_tensorcores", "tensorcores_per_chip",
                     "cores_per_chip"):
            val = getattr(info, name, None)
            if val is None:
                continue
            try:
                v = int(val)
            except Exception:
                continue
            if v > 0:
                two_tc = v >= 2
                break
    except Exception:
        pass
    kind = ""
    try:
        kind = jax.devices()[0].device_kind.lower()
    except Exception:
        pass
    if vmem is None:
        # v4/v5e/v6e expose 128 MiB VMEM per TensorCore; v7x only 64 MiB.
        if any(tag in kind for tag in ("v4", "v5", "v6")):
            vmem = 128 << 20
        else:
            vmem = 64 << 20
    if two_tc is None:
        two_tc = "7" in kind  # v7x has 2 TensorCores per chip
    return vmem, bool(two_tc)


# ---------------------------------------------------------------------------
# Tile selection helpers.
# ---------------------------------------------------------------------------
def _pick_channel_tile(c, hw, itemsize, target_bytes, forced=None):
    """Channel tile Tc for the fused path: Tc | C and (Tc % 8 == 0 or Tc == C)."""
    if forced is not None:
        f = int(forced)
        if 0 < f <= c and c % f == 0 and (f == c or f % 8 == 0):
            return f
    if c <= 8 or c % 8 != 0:
        return c
    if c * hw * itemsize <= target_bytes:
        return c
    best = 8
    tc = 8
    while tc <= c:
        if c % tc == 0 and tc * hw * itemsize <= target_bytes:
            best = tc
        tc += 8
    return best


def _pick_spatial_tile(hw, c, itemsize, target_bytes, forced=None):
    """Spatial tile T for the tiled path: T == HW or T is a multiple of 128."""
    if forced is not None:
        t = min(int(forced), hw)
        if t < hw:
            t = max(128, (t // 128) * 128)
        return hw if t >= hw else t
    t = max(1, target_bytes // max(1, c * itemsize))
    t = max(128, (t // 128) * 128)
    return hw if t >= hw else t


# ---------------------------------------------------------------------------
# Shared in-kernel gate = sigmoid(conv1d_k(pooled)) along the channel axis.
# ---------------------------------------------------------------------------
def _conv_sigmoid_gate(pooled, w_ref, k_size, c):
    """pooled: (C, 1) f32; w_ref: (k,) f32 in SMEM.  Returns (C, 1) f32 gate."""
    pad = (k_size - 1) // 2
    if pad > 0:
        z = jnp.zeros((pad, 1), dtype=jnp.float32)
        padded = jnp.concatenate([z, pooled, z], axis=0)  # (C + 2*pad, 1)
    else:
        padded = pooled
    conv = jnp.zeros((c, 1), dtype=jnp.float32)
    for tap in range(k_size):  # k_size is tiny & static
        conv = conv + w_ref[tap] * padded[tap:tap + c, :]
    return jax.nn.sigmoid(conv)


# ---------------------------------------------------------------------------
# Path A: fused per-batch kernel (resident (C, HW) slab + tiled output).
# ---------------------------------------------------------------------------
def _eca_fused_kernel(w_ref, x_ref, o_ref, pooled_sc, gate_sc, *,
                      k_size, inv_hw, c, tc, n_c):
    jc = pl.program_id(1)

    @pl.when(jc == 0)
    def _():
        # Global average pool over the spatial (lane) axis, in f32, then the
        # channel conv + sigmoid, once per batch element.
        if n_c == 1:
            pooled_sc[...] = (
                jnp.sum(x_ref[0].astype(jnp.float32), axis=-1, keepdims=True)
                * inv_hw)
        else:
            def body(idx, carry):
                r0 = pl.multiple_of(idx * tc, tc)
                rows = x_ref[0, pl.ds(r0, tc), :].astype(jnp.float32)
                pooled_sc[pl.ds(r0, tc), :] = (
                    jnp.sum(rows, axis=-1, keepdims=True) * inv_hw)
                return carry
            jax.lax.fori_loop(0, n_c, body, 0)
        gate_sc[...] = _conv_sigmoid_gate(pooled_sc[...], w_ref, k_size, c)

    # Multiply the jc-th channel slice of the resident slab by its gate rows.
    if n_c == 1:
        rows = x_ref[0].astype(jnp.float32)
        gate = gate_sc[...]
    else:
        r0 = pl.multiple_of(jc * tc, tc)
        rows = x_ref[0, pl.ds(r0, tc), :].astype(jnp.float32)
        gate = gate_sc[pl.ds(r0, tc), :]
    o_ref[0] = (rows * gate).astype(o_ref.dtype)


def _eca_fused(x3, conv_weight, k_size, hw, tc, vmem_limit):
    b, c, _ = x3.shape
    n_c = c // tc
    itemsize = jnp.dtype(x3.dtype).itemsize
    kernel = functools.partial(_eca_fused_kernel, k_size=k_size,
                               inv_hw=1.0 / hw, c=c, tc=tc, n_c=n_c)
    cost = pl.CostEstimate(
        flops=int(2 * b * c * hw + 2 * b * c * k_size),
        transcendentals=int(b * c),
        bytes_accessed=int(2 * b * c * hw * itemsize),
    )
    return pl.pallas_call(
        kernel,
        out_shape=jax.ShapeDtypeStruct((b, c, hw), x3.dtype),
        grid_spec=pltpu.PrefetchScalarGridSpec(
            num_scalar_prefetch=0,
            grid=(b, n_c),
            in_specs=[
                pl.BlockSpec(memory_space=pltpu.SMEM),             # conv weights
                pl.BlockSpec((1, c, hw), lambda i, j: (i, 0, 0)),  # resident slab
            ],
            out_specs=pl.BlockSpec((1, tc, hw), lambda i, j: (i, j, 0)),
            scratch_shapes=[pltpu.VMEM((c, 1), jnp.float32),       # pooled
                            pltpu.VMEM((c, 1), jnp.float32)],      # gate
        ),
        compiler_params=pltpu.CompilerParams(
            dimension_semantics=("parallel", "arbitrary"),
            vmem_limit_bytes=int(vmem_limit),
        ),
        cost_estimate=cost,
    )(conv_weight, x3)


# ---------------------------------------------------------------------------
# Path B: tiled two-stage path for large (C, HW) slabs / small B on 2-TC chips.
# ---------------------------------------------------------------------------
def _pool_sum_kernel(x_ref, s_ref, *, t, hw, n_t, n_chunk, n_split):
    j = pl.program_id(2)

    @pl.when(j == 0)
    def _():
        s_ref[...] = jnp.zeros_like(s_ref)

    g = pl.program_id(1) * n_chunk + j  # global HW-tile index

    def _accumulate():
        xs = x_ref[0].astype(jnp.float32)                  # (C, T)
        rem = hw - (n_t - 1) * t                           # valid lanes, last tile
        if rem < t:
            lane = jax.lax.broadcasted_iota(jnp.int32, xs.shape, 1)
            valid = jnp.where(g == n_t - 1, rem, t)
            xs = jnp.where(lane < valid, xs, 0.0)
        s_ref[0, 0] += jnp.sum(xs, axis=-1, keepdims=True)

    if n_split * n_chunk == n_t:
        _accumulate()
    else:
        pl.when(g < n_t)(_accumulate)


def _gated_mul_kernel(w_ref, s_ref, x_ref, o_ref, *, k_size, inv_hw, c, n_split):
    # Combine the HW-split partial sums (n_split is 1 or 2, static) and
    # recompute the tiny gate per step — cheap, hidden under the tile DMA,
    # and keeps both grid axes fully parallel.
    pooled = s_ref[0, 0]
    for s in range(1, n_split):
        pooled = pooled + s_ref[0, s]
    pooled = pooled * inv_hw                               # (C, 1) f32
    gate = _conv_sigmoid_gate(pooled, w_ref, k_size, c)    # (C, 1) f32
    o_ref[0] = (x_ref[0].astype(jnp.float32) * gate).astype(o_ref.dtype)


def _eca_tiled(x3, conv_weight, k_size, hw, t, n_split, vmem_limit):
    b, c, _ = x3.shape
    itemsize = jnp.dtype(x3.dtype).itemsize
    n_t = _cdiv(hw, t)
    n_split = min(n_split, n_t)
    n_chunk = _cdiv(n_t, n_split)

    # ---- Stage 1: per-(B, C) partial spatial sums in f32 over HW tiles.
    pool_kernel = functools.partial(_pool_sum_kernel, t=t, hw=hw, n_t=n_t,
                                    n_chunk=n_chunk, n_split=n_split)

    def _x_map_stage1(i, s, j):
        g = s * n_chunk + j
        return (i, 0, jnp.minimum(g, n_t - 1))  # clamp; extra steps skip the add

    sums = pl.pallas_call(
        pool_kernel,
        out_shape=jax.ShapeDtypeStruct((b, n_split, c, 1), jnp.float32),
        grid_spec=pltpu.PrefetchScalarGridSpec(
            num_scalar_prefetch=0,
            grid=(b, n_split, n_chunk),
            in_specs=[pl.BlockSpec((1, c, t), _x_map_stage1)],
            out_specs=pl.BlockSpec((1, 1, c, 1), lambda i, s, j: (i, s, 0, 0)),
        ),
        compiler_params=pltpu.CompilerParams(
            dimension_semantics=("parallel", "parallel", "arbitrary"),
            vmem_limit_bytes=int(vmem_limit),
        ),
        cost_estimate=pl.CostEstimate(
            flops=int(b * c * hw),
            transcendentals=0,
            bytes_accessed=int(b * c * hw * itemsize + b * n_split * c * 4),
        ),
    )(x3)

    # ---- Stage 2: gate (conv + sigmoid from the sums, in-kernel) + multiply.
    mul_kernel = functools.partial(_gated_mul_kernel, k_size=k_size,
                                   inv_hw=1.0 / hw, c=c, n_split=n_split)
    out = pl.pallas_call(
        mul_kernel,
        out_shape=jax.ShapeDtypeStruct((b, c, hw), x3.dtype),
        grid_spec=pltpu.PrefetchScalarGridSpec(
            num_scalar_prefetch=0,
            grid=(b, n_t),
            in_specs=[
                pl.BlockSpec(memory_space=pltpu.SMEM),                      # weights
                pl.BlockSpec((1, n_split, c, 1), lambda i, j: (i, 0, 0, 0)),  # sums
                pl.BlockSpec((1, c, t), lambda i, j: (i, 0, j)),            # x tile
            ],
            out_specs=pl.BlockSpec((1, c, t), lambda i, j: (i, 0, j)),
        ),
        compiler_params=pltpu.CompilerParams(
            dimension_semantics=("parallel", "parallel"),
            vmem_limit_bytes=int(vmem_limit),
        ),
        cost_estimate=pl.CostEstimate(
            flops=int(2 * b * c * hw + 2 * b * c * k_size),
            transcendentals=int(b * c),
            bytes_accessed=int(2 * b * c * hw * itemsize + b * n_split * c * 4),
        ),
    )(conv_weight, sums, x3)
    return out


# ---------------------------------------------------------------------------
# Public wrapper
# ---------------------------------------------------------------------------
def eca_layer(x_nchw: jax.Array, conv_weight: jax.Array, k_size: int = 3, *,
              force_tiled: bool = False, force_fused: bool = False,
              fused_channel_tile=None, spatial_tile=None,
              force_hw_split: bool = False) -> jax.Array:
    """ECA forward. x_nchw: (B, C, H, W). conv_weight: (k_size,) (or (1,1,k))."""
    assert x_nchw.ndim == 4, "expected NCHW input"
    b, c, h, w = x_nchw.shape
    hw = h * w
    itemsize = jnp.dtype(x_nchw.dtype).itemsize
    conv_weight = jnp.asarray(conv_weight).reshape(-1).astype(jnp.float32)
    assert conv_weight.shape[0] == k_size

    vmem_cap, two_tc = _tpu_caps()
    tile_target = (4 << 20) if vmem_cap >= (96 << 20) else (2 << 20)

    # (B, C, H, W) -> (B, C, HW) is a free reshape; no padding / slicing of x.
    x3 = x_nchw.reshape(b, c, hw)
    slab_bytes = c * hw * itemsize

    # --- Fused path sizing: resident slab (double-buffered) + tiled output.
    tc = _pick_channel_tile(c, hw, itemsize, tile_target, fused_channel_tile)
    f32_extra = 0 if x_nchw.dtype == jnp.float32 else tc * hw * 4
    fused_need = (2 * slab_bytes + 2 * tc * hw * itemsize + tc * hw * 4
                  + f32_extra + (2 << 20))
    fused_budget = min(int(0.75 * vmem_cap), 100 << 20)

    # --- Tiled path sizing.
    t = _pick_spatial_tile(hw, c, itemsize, tile_target, spatial_tile)
    n_t = _cdiv(hw, t)
    tiled_need = 4 * c * t * itemsize + 2 * c * t * 4 + (2 << 20)

    use_tiled = force_tiled or (not force_fused and (
        fused_need > fused_budget
        # Keep the 2nd TensorCore busy for single-image inference (v7x only).
        or (two_tc and b < 2 and n_t >= 2)))

    vmem_ceiling = int(0.85 * vmem_cap)
    if use_tiled:
        n_split = 2 if (n_t >= 2 and (force_hw_split or (two_tc and b < 2))) else 1
        vmem_limit = min(max(tiled_need, 8 << 20), vmem_ceiling)
        out3 = _eca_tiled(x3, conv_weight, k_size, hw, t, n_split, vmem_limit)
    else:
        vmem_limit = min(max(fused_need, 8 << 20), vmem_ceiling)
        out3 = _eca_fused(x3, conv_weight, k_size, hw, tc, vmem_limit)

    return out3.reshape(b, c, h, w)


# ---------------------------------------------------------------------------
# Pure-JAX reference (mirrors the PyTorch module) for verification.
# ---------------------------------------------------------------------------
def _eca_reference(x_nchw, conv_weight, k_size=3):
    b, c, h, w = x_nchw.shape
    conv_weight = jnp.asarray(conv_weight).reshape(-1).astype(jnp.float32)
    pooled = jnp.mean(x_nchw.astype(jnp.float32), axis=(2, 3))          # (B, C)
    pad = (k_size - 1) // 2
    padded = jnp.pad(pooled, ((0, 0), (pad, pad)))
    conv = jnp.zeros_like(pooled)
    for i in range(k_size):
        conv = conv + conv_weight[i] * padded[:, i:i + c]
    gate = jax.nn.sigmoid(conv)[:, :, None, None]
    return (x_nchw.astype(jnp.float32) * gate).astype(x_nchw.dtype)


if __name__ == "__main__":
    key = jax.random.PRNGKey(0)
    kx1, kx2, kx3, kw = jax.random.split(key, 4)

    K_SIZE = 3
    # Deterministic stand-in for nn.Conv1d(1, 1, 3, bias=False).weight.
    conv_w = jax.random.normal(kw, (K_SIZE,), dtype=jnp.float32) * 0.5

    # 1) Primary shape implied by the module: fused path (single channel tile).
    x1 = jax.random.normal(kx1, (2, 4, 16, 16), dtype=jnp.float32)
    ref1 = _eca_reference(x1, conv_w, K_SIZE)
    out1 = jax.block_until_ready(eca_layer(x1, conv_w, k_size=K_SIZE))
    assert out1.shape == x1.shape
    assert jnp.allclose(out1, ref1, atol=1e-5, rtol=1e-5), "fused path mismatch"

    # 2) Tiled two-stage path on the same input.
    out2 = jax.block_until_ready(
        eca_layer(x1, conv_w, k_size=K_SIZE, force_tiled=True))
    assert jnp.allclose(out2, ref1, atol=1e-5, rtol=1e-5), "tiled path mismatch"

    # 3) Fused path with multiple channel tiles (resident slab + tiled output).
    x3 = jax.random.normal(kx2, (2, 32, 16, 16), dtype=jnp.float32)
    ref3 = _eca_reference(x3, conv_w, K_SIZE)
    out3 = jax.block_until_ready(
        eca_layer(x3, conv_w, k_size=K_SIZE, force_fused=True,
                  fused_channel_tile=8))
    assert jnp.allclose(out3, ref3, atol=1e-5, rtol=1e-5), "fused-tiled mismatch"

    # 4) Tiled path with ragged HW tiles (HW=324, T=128) and a 2-way HW
    #    reduction split (exercises boundary blocks + lane masking + split).
    x4 = jax.random.normal(kx3, (1, 16, 18, 18), dtype=jnp.float32)
    ref4 = _eca_reference(x4, conv_w, K_SIZE)
    out4 = jax.block_until_ready(
        eca_layer(x4, conv_w, k_size=K_SIZE, force_tiled=True,
                  spatial_tile=128, force_hw_split=True))
    assert jnp.allclose(out4, ref4, atol=1e-5, rtol=1e-5), "ragged tiled mismatch"

    print("KERNEL_OK")
</pallas_src>

<mosaic_0001>
module attributes {stable_mosaic.version = 11 : i64} {
  func.func @_eca_fused_kernel(%arg0: i32, %arg1: i32, %arg2: memref<3xf32, #tpu.memory_space<smem>>, %arg3: memref<1x4x256xf32, #tpu.memory_space<vmem>>, %arg4: memref<1x4x256xf32, #tpu.memory_space<vmem>>, %arg5: memref<4x1xf32, #tpu.memory_space<vmem>>, %arg6: memref<4x1xf32, #tpu.memory_space<vmem>>) attributes {dimension_semantics = [#tpu.dimension_semantics<parallel>, #tpu.dimension_semantics<arbitrary>], iteration_bounds = array<i64: 2, 1>, scalar_prefetch = 0 : i64, scratch_operands = 2 : i64, tpu.core_type = #tpu.core_type<tc>, window_params = [{transform_indices = @transform_0, window_bounds = array<i64: 3>}, {transform_indices = @transform_1, window_bounds = array<i64: 1, 4, 256>}, {transform_indices = @transform_2, window_bounds = array<i64: 1, 4, 256>}]} {
    %c0_i32 = arith.constant 0 : i32
    %0 = arith.cmpi eq, %arg1, %c0_i32 : i32
    %1 = arith.extui %0 : i1 to i32
    %c0_i32_0 = arith.constant 0 : i32
    %2 = arith.cmpi ne, %1, %c0_i32_0 : i32
    scf.if %2 {
      %c0_8 = arith.constant 0 : index
      %c0_9 = arith.constant 0 : index
      %c0_10 = arith.constant 0 : index
      %11 = vector.load %arg3[%c0_8, %c0_9, %c0_10] : memref<1x4x256xf32, #tpu.memory_space<vmem>>, vector<1x4x256xf32>
      %12 = vector.shape_cast %11 : vector<1x4x256xf32> to vector<4x256xf32>
      %cst = arith.constant dense<0.000000e+00> : vector<4xf32>
      %13 = vector.multi_reduction <add>, %12, %cst [1] : vector<4x256xf32> to vector<4xf32>
      %14 = vector.shape_cast %13 : vector<4xf32> to vector<4x1xf32>
      %cst_11 = arith.constant 3.906250e-03 : f32
      %15 = vector.broadcast %cst_11 : f32 to vector<4x1xf32>
      %16 = arith.mulf %14, %15 : vector<4x1xf32>
      %c0_12 = arith.constant 0 : index
      %c0_13 = arith.constant 0 : index
      %17 = vector.load %arg5[%c0_12, %c0_13] : memref<4x1xf32, #tpu.memory_space<vmem>>, vector<4x1xf32>
      tpu.vector_store %arg5[%c0_12, %c0_13], %16 {strides = array<i32>} : memref<4x1xf32, #tpu.memory_space<vmem>>, vector<4x1xf32>,
      %c0_14 = arith.constant 0 : index
      %c0_15 = arith.constant 0 : index
      %18 = vector.load %arg5[%c0_14, %c0_15] : memref<4x1xf32, #tpu.memory_space<vmem>>, vector<4x1xf32>
      %cst_16 = arith.constant 0.000000e+00 : f32
      %19 = vector.broadcast %cst_16 : f32 to vector<1x1xf32>
      %20 = tpu.concatenate %19, %18, %19 in 0 : vector<1x1xf32>, vector<4x1xf32>, vector<1x1xf32> -> vector<6x1xf32>
      %cst_17 = arith.constant 0.000000e+00 : f32
      %21 = vector.broadcast %cst_17 : f32 to vector<4x1xf32>
      %c0_18 = arith.constant 0 : index
      %22 = memref.load %arg2[%c0_18] : memref<3xf32, #tpu.memory_space<smem>>
      %23 = vector.extract_strided_slice %20 {offsets = [0, 0], sizes = [4, 1], strides = [1, 1]} : vector<6x1xf32> to vector<4x1xf32>
      %24 = vector.broadcast %22 : f32 to vector<4x1xf32>
      %25 = arith.mulf %24, %23 : vector<4x1xf32>
      %26 = arith.addf %21, %25 : vector<4x1xf32>
      %c1 = arith.constant 1 : index
      %27 = memref.load %arg2[%c1] : memref<3xf32, #tpu.memory_space<smem>>
      %28 = vector.extract_strided_slice %20 {offsets = [1, 0], sizes = [4, 1], strides = [1, 1]} : vector<6x1xf32> to vector<4x1xf32>
      %29 = vector.broadcast %27 : f32 to vector<4x1xf32>
      %30 = arith.mulf %29, %28 : vector<4x1xf32>
      %31 = arith.addf %26, %30 : vector<4x1xf32>
      %c2 = arith.constant 2 : index
      %32 = memref.load %arg2[%c2] : memref<3xf32, #tpu.memory_space<smem>>
      %33 = vector.extract_strided_slice %20 {offsets = [2, 0], sizes = [4, 1], strides = [1, 1]} : vector<6x1xf32> to vector<4x1xf32>
      %34 = vector.broadcast %32 : f32 to vector<4x1xf32>
      %35 = arith.mulf %34, %33 : vector<4x1xf32>
      %36 = arith.addf %31, %35 : vector<4x1xf32>
      %37 = arith.negf %36 : vector<4x1xf32>
      %38 = math.exp %37 : vector<4x1xf32>
      %cst_19 = arith.constant 1.000000e+00 : f32
      %39 = vector.broadcast %cst_19 : f32 to vector<4x1xf32>
      %40 = arith.addf %39, %38 : vector<4x1xf32>
      %41 = arith.divf %39, %40 : vector<4x1xf32>
      %c0_20 = arith.constant 0 : index
      %c0_21 = arith.constant 0 : index
      %42 = vector.load %arg6[%c0_20, %c0_21] : memref<4x1xf32, #tpu.memory_space<vmem>>, vector<4x1xf32>
      tpu.vector_store %arg6[%c0_20, %c0_21], %41 {strides = array<i32>} : memref<4x1xf32, #tpu.memory_space<vmem>>, vector<4x1xf32>,
    } else {
    }
    %c0 = arith.constant 0 : index
    %c0_1 = arith.constant 0 : index
    %c0_2 = arith.constant 0 : index
    %3 = vector.load %arg3[%c0, %c0_1, %c0_2] : memref<1x4x256xf32, #tpu.memory_space<vmem>>, vector<1x4x256xf32>
    %4 = vector.shape_cast %3 : vector<1x4x256xf32> to vector<4x256xf32>
    %c0_3 = arith.constant 0 : index
    %c0_4 = arith.constant 0 : index
    %5 = vector.load %arg6[%c0_3, %c0_4] : memref<4x1xf32, #tpu.memory_space<vmem>>, vector<4x1xf32>
    %6 = vector.broadcast %5 : vector<4x1xf32> to vector<4x256xf32>
    %7 = arith.mulf %4, %6 : vector<4x256xf32>
    %c0_5 = arith.constant 0 : index
    %c0_6 = arith.constant 0 : index
    %c0_7 = arith.constant 0 : index
    %8 = vector.load %arg4[%c0_5, %c0_6, %c0_7] : memref<1x4x256xf32, #tpu.memory_space<vmem>>, vector<1x4x256xf32>
    %9 = vector.shape_cast %8 : vector<1x4x256xf32> to vector<4x256xf32>
    %10 = vector.shape_cast %7 : vector<4x256xf32> to vector<1x4x256xf32>
    tpu.vector_store %arg4[%c0_5, %c0_6, %c0_7], %10 {strides = array<i32>} : memref<1x4x256xf32, #tpu.memory_space<vmem>>, vector<1x4x256xf32>,
    return
  }
  func.func @transform_0(%arg0: i32, %arg1: i32) -> i32 {
    %c0_i32 = arith.constant 0 : i32
    %c0_i32_0 = arith.constant 0 : i32
    return %c0_i32 : i32
  }
  func.func @transform_1(%arg0: i32, %arg1: i32) -> (i32, i32, i32) {
    %c0_i32 = arith.constant 0 : i32
    %c0_i32_0 = arith.constant 0 : i32
    %c0_i32_1 = arith.constant 0 : i32
    return %arg0, %c0_i32, %c0_i32_0 : i32, i32, i32
  }
  func.func @transform_2(%arg0: i32, %arg1: i32) -> (i32, i32, i32) {
    %c0_i32 = arith.constant 0 : i32
    %c0_i32_0 = arith.constant 0 : i32
    return %arg0, %arg1, %c0_i32 : i32, i32, i32
  }
}

</mosaic_0001>

<llo_original>
// kernel: tpu_custom_call.1
$region0: #{tpu_custom_call.1}
  #allocation0 [shape = 'u32[]', space=smem, size = 0x4, offset = 0x4, fixed_abs, tag = 'smem constant byte address 0x4 - core index']
  #allocation1 [shape = 'u32[72,128]{1,0:T(1,128)}', space=vmem, size = 0x9000, scoped, tag = 'internal scratch']
  #allocation2 [shape = 'f32[4,1]{1,0:T(4,128)}', space=vmem, size = 0x800, scoped, tag = 'scratch operand']
  #allocation3 [shape = 'f32[4,1]{1,0:T(4,128)}', space=vmem, size = 0x800, scoped, tag = 'scratch operand']
  %s0 = inlined_call_operand.hbm [shape: f32[3], index: 0, kind: input, shape index: {}]
  %s1 = inlined_call_operand.hbm [shape: f32[2,4,256], index: 1, kind: input, shape index: {}]
  %s2 = inlined_call_operand.hbm [shape: f32[2,4,256], index: 2, kind: output, shape index: {}]
  %s3 = sld [smem:[#allocation0]]
  $region53: #{tpu_custom_call.1} parent=0
    _
  %s5 = ssub.s32 1, %s3
  %s6 = scalar_select 0, %s5, %s3
  $region1: #{tpu_custom_call.1} parent=0
    #allocation4 [shape = 'u8[512]{0}', space=smem, size = 0x200, scoped, tag = 'input window, operand 0, single buffered']
    #allocation5 [shape = 's32[2]{0}', space=sflag, size = 0x8, scoped, tag = 'scoped memory for tpu_custom_call.1']
    #allocation6 [shape = 's32[2]{0}', space=sflag, size = 0x8, scoped, tag = 'scoped memory for tpu_custom_call.1']
    #allocation7 [shape = 's32[2]{0}', space=sflag, size = 0x8, scoped, tag = 'scoped memory for tpu_custom_call.1']
    #allocation8 [shape = 'u8[8192]{0}', space=vmem, size = 0x2000, scoped, tag = 'input window, operand 1']
    #allocation9 [shape = 'u8[8192]{0}', space=vmem, size = 0x2000, scoped, tag = 'output window, operand 0']
    %7 = vsyncpa [#allocation7], 0
    %8 = vsyncpa [#allocation5], 0
    %s9 = scalar_lea.sflag [#allocation5], 1
    %10 = vsyncpa %s9, 0
    %11 = vsyncpa [#allocation6], 0
    %s12 = scalar_lea.sflag [#allocation6], 1
    %13 = vsyncpa %s12, 0
    loop: start=0, step=1, limit=4
    $region2: #{tpu_custom_call.1} parent=1 // loop_pre_header
      _
    $region3: #{tpu_custom_call.1} parent=1 // loop_header
      %s15 = sphi 0, %s19
      %p16 = scmp.ge.s32.totalorder %s15, 4
      %s22 = sphi 0, %s34
      %s23 = sphi 0, %s30
      %s24 = sphi 0, %s22
      %s25 = sphi 0, %s23
      %s26 = sphi 0, %s24
      %s27 = sphi 0, %s25
      %s35 = sphi 0, %s35
      %s37 = sphi 0, %s35
      %s38 = sphi 0, %s37
      %s52 = sphi 0, %s38
      %s58 = sphi 0, %s60
      %s61 = sphi 0, %s58
      %s62 = sphi 0, %s61
      %s78 = sphi 0, %s62
      %s86 = sphi 0, %s88
      %s89 = sphi 0, %s86
      %s90 = sphi 0, %s89
      %s106 = sphi 0, %s90
    $region4: #{tpu_custom_call.1} parent=1 // loop_header_branch
      %18 = sbr.rel (%p16) target = $region8
    $region5: #{tpu_custom_call.1} parent=1 // loop_body
      %s20 = ssub.s32 %s15, 1
      %s21 = ssub.s32 %s15, 2
      %s28 = sadd.s32 1, %s23
      %p29 = scmp.ge.s32.totalorder %s28, 1
      %s30 = scalar_select %p29, 0, %s28
      %s31 = sadd.s32 1, %s22
      %s32 = scalar_select %p29, %s31, %s22
      %p33 = scmp.ge.s32.totalorder %s32, 2
      %s34 = scalar_select %p33, 0, %s32
      %s36 = sadd.s32 %s35, 1
      %p39 = scmp.eq.s32.totalorder %s15, 1
      %p40 = scmp.ne.s32.totalorder %s35, %s37
      %p41 = scmp.eq.s32.totalorder %s15, 0
      %p42 = por %p40, %p41
      %p43 = scmp.ne.s32.totalorder %s35, %s37
      %p44 = scmp.eq.s32.totalorder %s20, 1
      %p45 = por %p43, %p44
      %p46 = scmp.ne.s32.totalorder %s37, %s38
      %p47 = scmp.eq.s32.totalorder %s20, 0
      %p48 = por %p46, %p47
      %p49 = scmp.ne.s32.totalorder %s37, %s38
      %p50 = scmp.eq.s32.totalorder %s21, 1
      %p51 = por %p49, %p50
      %p53 = scmp.ne.s32.totalorder %s38, %s52
      %p54 = scmp.eq.s32.totalorder %s21, 0
      %p55 = por %p53, %p54
      %s56 = ssub.s32 %s22, %s34
      %p57 = scmp.eq.s32.totalorder %s56, 0
      %s59 = sadd.s32 %s58, 1
      %s60 = scalar_select %p57, %s58, %s59
      %p63 = pneg %p57
      %p64 = scmp.eq.s32.totalorder %s15, 1
      %p65 = por %p63, %p64
      %p66 = scmp.ne.s32.totalorder %s58, %s61
      %p67 = scmp.eq.s32.totalorder %s15, 0
      %p68 = por %p66, %p67
      %p69 = scmp.ne.s32.totalorder %s58, %s61
      %p70 = scmp.eq.s32.totalorder %s20, 1
      %p71 = por %p69, %p70
      %p72 = scmp.ne.s32.totalorder %s61, %s62
      %p73 = scmp.eq.s32.totalorder %s20, 0
      %p74 = por %p72, %p73
      %p75 = scmp.ne.s32.totalorder %s61, %s62
      %p76 = scmp.eq.s32.totalorder %s21, 1
      %p77 = por %p75, %p76
      %p79 = scmp.ne.s32.totalorder %s62, %s78
      %p80 = scmp.eq.s32.totalorder %s21, 0
      %p81 = por %p79, %p80
      %s82 = ssub.s32 %s22, %s34
      %s83 = ssub.s32 %s23, %s30
      %s84 = sor.u32 %s82, %s83
      %p85 = scmp.eq.s32.totalorder %s84, 0
      %s87 = sadd.s32 %s86, 1
      %s88 = scalar_select %p85, %s86, %s87
      %p91 = pneg %p85
      %p92 = scmp.eq.s32.totalorder %s15, 1
      %p93 = por %p91, %p92
      %p94 = scmp.ne.s32.totalorder %s86, %s89
      %p95 = scmp.eq.s32.totalorder %s15, 0
      %p96 = por %p94, %p95
      %p97 = scmp.ne.s32.totalorder %s86, %s89
      %p98 = scmp.eq.s32.totalorder %s20, 1
      %p99 = por %p97, %p98
      %p100 = scmp.ne.s32.totalorder %s89, %s90
      %p101 = scmp.eq.s32.totalorder %s20, 0
      %p102 = por %p100, %p101
      %p103 = scmp.ne.s32.totalorder %s89, %s90
      %p104 = scmp.eq.s32.totalorder %s21, 1
      %p105 = por %p103, %p104
      %p107 = scmp.ne.s32.totalorder %s90, %s106
      %p108 = scmp.eq.s32.totalorder %s21, 0
      %p109 = por %p107, %p108
      %p110 = scmp.le.s32.totalorder 1, %s15
      %p111 = scmp.lt.s32.totalorder %s15, 3
      %p112 = pnand %p110, %p111
      %p113 = pneg %p112
      // Predicated region
      $region9: #{tpu_custom_call.1} parent=5 // pred_check
        _
      $region10: #{tpu_custom_call.1} parent=5 // pred_check_branch
        %115 = sbr.rel (%p112) target = $region12
      $region11: #{tpu_custom_call.1} parent=5 // pred_region
        %s116 = ssub.s32 %s15, 1
        // Predicated region
        $region13: #{tpu_custom_call.1} parent=11 // pred_check
          %p117 = pneg %p48
        $region14: #{tpu_custom_call.1} parent=11 // pred_check_branch
          %119 = sbr.rel (%p117) target = $region16
        $region15: #{tpu_custom_call.1} parent=11 // pred_region
          %121 = vsyncadd [#allocation7], 0
          %s123 = sshll.u32 %s0, 4
          %s124 = int_to_ptr.hbm [resolvable:$true] %s123
          %126 = dma.hbm_to_smem %s124, 16, [#allocation4], [#allocation7]
        $region16: #{tpu_custom_call.1} parent=11 // pred_fallthru
          _
      $region12: #{tpu_custom_call.1} parent=5 // pred_fallthru
        _
      %p127 = scmp.lt.s32.totalorder %s15, 2
      // Predicated region
      $region17: #{tpu_custom_call.1} parent=5 // pred_check
        %p128 = pneg %p127
      $region18: #{tpu_custom_call.1} parent=5 // pred_check_branch
        %130 = sbr.rel (%p128) target = $region20
      $region19: #{tpu_custom_call.1} parent=5 // pred_region
        // Predicated region
        $region21: #{tpu_custom_call.1} parent=19 // pred_check
          %p131 = pneg %p68
        $region22: #{tpu_custom_call.1} parent=19 // pred_check_branch
          %133 = sbr.rel (%p131) target = $region24
        $region23: #{tpu_custom_call.1} parent=19 // pred_region
          %s134 = sand.u32 %s58, 1
          %s135 = scalar_lea.sflag [#allocation5], %s134
          %s136 = sand.u32 %s58, 1
          %s137 = smul.addr %s136, 8
          %s138 = scalar_lea.vmem [#allocation8], %s137
          %140 = vsyncadd %s135, 0
          %s141 = smul.addr %s22, 2
          %s142 = smul.addr %s141, 4
          %s143 = scalar_lea.hbm %s1, %s142
          %s145 = sshll.u32 %s143, 4
          %s146 = int_to_ptr.hbm [resolvable:$true] %s145
          %s147 = sshll.u32 %s138, 4
          %s148 = int_to_ptr.vmem [resolvable:$true] %s147
          %150 = dma.hbm_to_vmem [thread:$0]  %s146, 128, %s148, %s135
        $region24: #{tpu_custom_call.1} parent=19 // pred_fallthru
          _
      $region20: #{tpu_custom_call.1} parent=5 // pred_fallthru
        _
      %p151 = scmp.le.s32.totalorder 1, %s15
      %p152 = scmp.lt.s32.totalorder %s15, 3
      %p153 = pnand %p151, %p152
      %p154 = pneg %p153
      // Predicated region
      $region25: #{tpu_custom_call.1} parent=5 // pred_check
        _
      $region26: #{tpu_custom_call.1} parent=5 // pred_check_branch
        %156 = sbr.rel (%p153) target = $region28
      $region27: #{tpu_custom_call.1} parent=5 // pred_region
        %s157 = ssub.s32 %s15, 1
        // Predicated region
        $region29: #{tpu_custom_call.1} parent=27 // pred_check
          %p158 = pneg %p48
        $region30: #{tpu_custom_call.1} parent=27 // pred_check_branch
          %160 = sbr.rel (%p158) target = $region32
        $region31: #{tpu_custom_call.1} parent=27 // pred_region
          %162 = dma.done [#allocation7], 16
        $region32: #{tpu_custom_call.1} parent=27 // pred_fallthru
          _
        %s163 = sand.u32 %s61, 1
        %s164 = scalar_lea.sflag [#allocation5], %s163
        %s165 = sand.u32 %s61, 1
        %s166 = smul.addr %s165, 8
        %s167 = scalar_lea.vmem [#allocation8], %s166
        // Predicated region
        $region33: #{tpu_custom_call.1} parent=27 // pred_check
          %p168 = pneg %p74
        $region34: #{tpu_custom_call.1} parent=27 // pred_check_branch
          %170 = sbr.rel (%p168) target = $region36
        $region35: #{tpu_custom_call.1} parent=27 // pred_region
          %172 = dma.done %s164, 128
        $region36: #{tpu_custom_call.1} parent=27 // pred_fallthru
          _
        %173 = sfence
        %p174 = pneg %p48
        %p175 = pneg %p45
        %s176 = sand.u32 %s61, 1
        %s177 = scalar_lea.sflag [#allocation5], %s176
        %s178 = sand.u32 %s61, 1
        %s179 = smul.addr %s178, 8
        %s180 = scalar_lea.vmem [#allocation8], %s179
        %p181 = pneg %p74
        %p182 = pneg %p71
        %p183 = pneg %p102
        %p184 = pneg %p99
        %s185 = sand.u32 %s89, 1
        %s186 = scalar_lea.sflag [#allocation6], %s185
        %s187 = sand.u32 %s89, 1
        %s188 = smul.addr %s187, 8
        %s189 = scalar_lea.vmem [#allocation9], %s188
        %p190 = scmp.eq.s32.totalorder %s25, 0
        // Predicated region
        $region37: #{tpu_custom_call.1} parent=27 // pred_check
          %p191 = pneg %p190
        $region38: #{tpu_custom_call.1} parent=27 // pred_check_branch
          %193 = sbr.rel (%p191) target = $region40
        $region39: #{tpu_custom_call.1} parent=27 // pred_region
          %v194 = vld [vmem:[%s167] sm:$0xff]
          %196 = vst [vmem:[#allocation1] ss:$2 sm:$0xff] %v194
          %v197 = vld.sshfl [vmem:[#allocation1] sm:$0xff pattern:$0x75316420]
          %v198 = vld.sshfl [vmem:[#allocation1 + $0x8] sm:$0xff pattern:$0x75316420]
          %vm201 = vcmask 1043456
          %v202 = vsel %vm201, %v197, 0.0
          %v203 = vsel %vm201, %v198, 0.0
          %v204 = vadd.f32 %v202, %v203
          %205 = vadd.xlane.f32.xlu0 %v204
          %v206 = vpop.xlane.xlu0 %205
          %v207 = vmul.f32 %v206, 0.00390625
          %vm208 = vcmask 3072
          %209 = vst.msk [vmem:[#allocation2] sm:$0xf] %vm208, %v207
          %v210 = vld [vmem:[#allocation2] sm:$0xf]
          %v212 = vrot.slane %v210, 7
          %vm214 = vcmask 1040384
          %v215 = vsel %vm214, 0.0, %v212
          %vm216 = vcmask 1044480
          %v217 = vsel %vm216, %v215, 0.0
          %s218 = sld [smem:[#allocation4]]
          %v219 = vstv %s218
          %v220 = vmul.f32 %v219, %v217
          %v221 = vadd.f32 %v220, 0.0
          %s222 = sld [smem:[#allocation4 + $0x1]]
          %v223 = vstv %s222
          %v224 = vmul.f32 %v223, %v217
          %v226 = vrot.slane %v224, 1
          %v228 = vadd.f32 %v221, %v226
          %s229 = sld [smem:[#allocation4 + $0x2]]
          %v230 = vstv %s229
          %v231 = vmul.f32 %v230, %v217
          %v233 = vrot.slane %v231, 2
          %v235 = vadd.f32 %v228, %v233
          %v236 = vxor.u32 %v235, 2147483648
          %v237 = vmul.f32 %v236, 1.442695
          %v238 = vpow.pop %v237
          %v239 = vadd.f32 %v238, 1.0
          %v240 = vrcp.pop %v239
          %v241 = vmul.f32 %v239, %v240
          %v242 = vsub.f32 1.0, %v241
          %v243 = vmul.f32 %v240, %v242
          %v244 = vadd.f32 %v240, %v243
          %vm245 = vweird.f32 %v239
          %vm246 = vweird.f32 %v240
          %vm247 = vmor %vm245, %vm246
          %v248 = vsel %vm247, %v240, %v244
          %v249 = vand.u32 2147483647, %v239
          %vm250 = vcmp.eq.f32.partialorder %v249, 8.507059e+37
          %v251 = vand.u32 %v239, 2147483648
          %v252 = vor.u32 1.1754944e-38, %v251
          %v253 = vsel %vm250, %v252, %v248
          %v254 = vmul.f32 1.0, %v253
          %255 = vst.msk [vmem:[#allocation3] sm:$0xf] %vm208, %v254
        $region40: #{tpu_custom_call.1} parent=27 // pred_fallthru
          _
        %v256 = vld [vmem:[%s167] sm:$0xff]
        %v257 = vld [vmem:[#allocation3] sm:$0xf]
        %259 = vset.pattern.permute.xlu0 0
        %260 = vperm.xlu0 %259, %v257
        %v261 = vpop.permute.xlu0 %260
        %v263 = vunpack.c.l.s4 839922192
        %v264 = vunpack.c.0.s8 %v263
        %v265 = vperm.slane %v261, %v264
        %v267 = vmul.f32 %v256, %v265
        %268 = vst [vmem:[%s189] sm:$0xff] %v267
        %s269 = sand.u32 %s89, 1
        %s270 = scalar_lea.sflag [#allocation6], %s269
        %s271 = sand.u32 %s89, 1
        %s272 = smul.addr %s271, 8
        %s273 = scalar_lea.vmem [#allocation9], %s272
        // Predicated region
        $region41: #{tpu_custom_call.1} parent=27 // pred_check
          %p274 = pneg %p99
        $region42: #{tpu_custom_call.1} parent=27 // pred_check_branch
          %276 = sbr.rel (%p274) target = $region44
        $region43: #{tpu_custom_call.1} parent=27 // pred_region
          %278 = vsyncadd %s270, 0
          %s279 = smul.addr %s25, 2
          %s280 = smul.addr %s24, 2
          %s281 = sadd.s32 %s279, %s280
          %s282 = smul.addr %s281, 4
          %s283 = scalar_lea.hbm %s2, %s282
          %s285 = sshll.u32 %s273, 4
          %s286 = int_to_ptr.vmem [resolvable:$true] %s285
          %s287 = sshll.u32 %s283, 4
          %s288 = int_to_ptr.hbm [resolvable:$true] %s287
          %290 = dma.vmem_to_hbm [thread:$0]  %s286, 128, %s288, %s270
        $region44: #{tpu_custom_call.1} parent=27 // pred_fallthru
          _
      $region28: #{tpu_custom_call.1} parent=5 // pred_fallthru
        _
      %p291 = scmp.le.s32.totalorder 2, %s15
      // Predicated region
      $region45: #{tpu_custom_call.1} parent=5 // pred_check
        %p292 = pneg %p291
      $region46: #{tpu_custom_call.1} parent=5 // pred_check_branch
        %294 = sbr.rel (%p292) target = $region48
      $region47: #{tpu_custom_call.1} parent=5 // pred_region
        %s295 = ssub.s32 %s15, 2
        // Predicated region
        $region49: #{tpu_custom_call.1} parent=47 // pred_check
          %p296 = pneg %p105
        $region50: #{tpu_custom_call.1} parent=47 // pred_check_branch
          %298 = sbr.rel (%p296) target = $region52
        $region51: #{tpu_custom_call.1} parent=47 // pred_region
          %s299 = sand.u32 %s90, 1
          %s300 = scalar_lea.sflag [#allocation6], %s299
          %s301 = sand.u32 %s90, 1
          %s302 = smul.addr %s301, 8
          %s303 = scalar_lea.vmem [#allocation9], %s302
          %305 = dma.done %s300, 128
        $region52: #{tpu_custom_call.1} parent=47 // pred_fallthru
          _
      $region48: #{tpu_custom_call.1} parent=5 // pred_fallthru
        _
    $region6: #{tpu_custom_call.1} parent=1 // loop_footer
      %s19 = sadd.s32 1, %s15
    $region7: #{tpu_custom_call.1} parent=1 // loop_footer_branch
      %14 = sbr.rel target = $region3
    $region8: #{tpu_custom_call.1} parent=1 // loop_exit
      _
    %306 = vsyncpa [#allocation5], 1
    %s307 = scalar_lea.sflag [#allocation5], 1
    %308 = vsyncpa %s307, 1
    %309 = vsyncpa [#allocation6], 1
    %s310 = scalar_lea.sflag [#allocation6], 1
    %311 = vsyncpa %s310, 1
    %312 = vsyncpa [#allocation7], 1
    %s313 = scalar_lea.sflag [#allocation7], 1
    %314 = vsyncpa %s313, 1

</llo_original>
